<compile_context>
chip_gen: v5e
topology: v5e:2x2
jax: 0.10.0
libtpu: 0.0.40
codegen_flags: <defaults>
</compile_context>

<pallas_src>
import jax
import jax.numpy as jnp
from jax.experimental import pallas as pl
from jax.experimental.pallas import tpu as pltpu


_NEG_LARGE = -1e30  # finite stand-in for -inf: keeps the running max well
                    # defined even when a whole tile/column is masked.


def _attn_kernel(lens_ref, q_ref, k_ref, v_ref, o_ref, m_ref, l_ref, acc_ref):
    """One (B_TILE batch lanes) x (T_TILE sequence steps) attention step.

    lens_ref: (1, B_T) int32          valid length per batch column
    q_ref:    (K, B_T)   in-dtype     queries                    (B on lanes)
    k_ref:    (T_T, K, B_T) in-dtype  keys for this T tile
    v_ref:    (T_T, D, B_T) in-dtype  values for this T tile
    o_ref:    (D, B_T)   out-dtype    output block (written on last T tile)
    m_ref:    (1, B_T) f32            running max        (online softmax)
    l_ref:    (1, B_T) f32            running denominator
    acc_ref:  (D, B_T) f32            running weighted value sum
    """
    t = pl.program_id(1)
    t_tile = k_ref.shape[0]

    @pl.when(t == 0)
    def _init():
        m_ref[...] = jnp.full_like(m_ref, _NEG_LARGE)
        l_ref[...] = jnp.zeros_like(l_ref)
        acc_ref[...] = jnp.zeros_like(acc_ref)

    q = q_ref[...]                              # (K, B_T), input dtype
    k = k_ref[...]                              # (T_T, K, B_T), input dtype

    # --- score: e[t, b] = <query[b], key[t, b]> ------------------------------
    # Multiplies stay in the input dtype (bf16 on bf16 inputs); accumulation is
    # f32.  The contraction axis K sits on SUBLANES, so this is VPU adds across
    # K/8 vregs plus one 8-wide sublane reduce per slab -- no lane-axis XLU
    # reduce, and e lands with B on lanes (no relayout).
    e = jnp.sum(k * q[None, :, :], axis=1, dtype=jnp.float32)   # (T_T, B_T)

    # --- mask built in-kernel from per-batch lengths (no (T, B) mask DMA). ---
    # Also neutralizes the garbage rows of the ragged last T tile.
    t_pos = jax.lax.broadcasted_iota(jnp.int32, e.shape, 0) + t * t_tile
    keep = t_pos < lens_ref[...]                # (T_T, B_T), lens broadcasts
    e = jnp.where(keep, e, _NEG_LARGE)

    # --- online softmax over the T axis (all stats are (1, B_T) lane rows) ---
    m_prev = m_ref[...]
    m_curr = jnp.maximum(m_prev, jnp.max(e, axis=0, keepdims=True))  # sublane max
    alpha = jnp.exp(m_prev - m_curr)                                  # (1, B_T)
    p = jnp.where(keep, jnp.exp(e - m_curr), 0.0)                     # (T_T, B_T) f32
    l_ref[...] = alpha * l_ref[...] + jnp.sum(p, axis=0, keepdims=True)
    m_ref[...] = m_curr

    # --- weighted value sum folded into the running accumulator --------------
    # Zero masked value rows as well: the ragged T tail reads uninitialized
    # VMEM which may hold NaN/Inf bit patterns, and 0 * NaN would poison acc.
    v = jnp.where(keep[:, None, :], v_ref[...], 0).astype(v_ref.dtype)
    pv = jnp.sum(p.astype(v.dtype)[:, None, :] * v, axis=0,
                 dtype=jnp.float32)                                   # (D, B_T)
    acc_ref[...] = alpha * acc_ref[...] + pv      # (1,B) row broadcast, native

    # --- finalize on the last T tile -----------------------------------------
    @pl.when(t == pl.num_programs(1) - 1)
    def _finalize():
        l_safe = jnp.maximum(l_ref[...], 1e-30)
        inv_l = pl.reciprocal(l_safe, approx=True)     # EUP vrcp (free slot)
        inv_l = inv_l * (2.0 - l_safe * inv_l)         # Newton step -> ~f32
        o_ref[...] = (acc_ref[...] * inv_l).astype(o_ref.dtype)


def _round_up(x, m):
    return ((x + m - 1) // m) * m


def _vmem_capacity_bytes():
    try:
        return int(pltpu.get_tpu_info().vmem_capacity_bytes)
    except Exception:
        return 64 << 20   # conservative (v7x-class); v5e/v6e have 128 MiB


def _vmem_block_bytes(t_tile, K, D, b_tile, in_bytes, out_bytes):
    """Rough per-core VMEM footprint for a given tiling (double-buffered)."""
    dbl = 2  # BlockSpec double-buffering
    key_blk = t_tile * K * b_tile * in_bytes
    val_blk = t_tile * D * b_tile * in_bytes
    q_blk = K * b_tile * in_bytes
    len_blk = b_tile * 4
    out_blk = D * b_tile * out_bytes
    scratch = (2 + D) * b_tile * 4
    # in-kernel temporaries (k*q product slab, masked v copy, p, pv), f32-width
    # for the product to stay conservative.
    tmp = (t_tile * K * 4 + t_tile * D * in_bytes + 2 * t_tile * 4 + D * 4) * b_tile
    return dbl * (key_blk + val_blk + q_blk + len_blk + out_blk) + scratch + tmp


def global_soft_attention(query, key, value, lengths=None, *,
                          b_tile=None, t_tile=None, inputs_transposed=False):
    """Masked global soft attention with a dot-product score.

    Canonical layout (inputs_transposed=False, matches the PyTorch module,
    dim=0):   query (B, K), key (T, B, K), value (T, B, D).
    Kernel-native layout (inputs_transposed=True; batch minor so it sits on the
    128-wide lane axis): query (K, B), key (T, K, B), value (T, D, B).
    In the module's canonical decoder use the encoder outputs are attended to
    every step, so transpose once upstream and pass inputs_transposed=True; the
    canonical path below transposes for you (one extra HBM pass).

    lengths: optional (B,) int; position t of batch b participates iff
             t < lengths[b] (the canonical padded-sequence mask).
    Returns (B, D) in value.dtype.
    """
    if inputs_transposed:
        q_kb, k_tkb, v_tdb = query, key, value
        if q_kb.ndim != 2:
            raise ValueError(f"query must be (K, B); got {q_kb.shape}")
        K, B = q_kb.shape
        if k_tkb.ndim != 3 or k_tkb.shape[1:] != (K, B):
            raise ValueError(f"key must be (T, K, B); got {k_tkb.shape}")
        T = k_tkb.shape[0]
        if v_tdb.ndim != 3 or v_tdb.shape[0] != T or v_tdb.shape[2] != B:
            raise ValueError(f"value must be (T, D, B); got {v_tdb.shape}")
        D = v_tdb.shape[1]
    else:
        if query.ndim != 2:
            raise ValueError(f"query must be (B, K); got {query.shape}")
        B, K = query.shape
        if key.ndim != 3 or key.shape[1:] != (B, K):
            raise ValueError(f"key must be (T, B, K); got {key.shape}")
        T = key.shape[0]
        if value.ndim != 3 or value.shape[:2] != (T, B):
            raise ValueError(f"value must be (T, B, D); got {value.shape}")
        D = value.shape[2]
        # One-time layout change to the batch-on-lanes kernel layout.
        q_kb = query.T
        k_tkb = jnp.transpose(key, (0, 2, 1))
        v_tdb = jnp.transpose(value, (0, 2, 1))

    q_kb = q_kb.astype(k_tkb.dtype)   # keep the score multiplies in key dtype

    if lengths is None:
        lengths = jnp.full((B,), T, dtype=jnp.int32)
    lens_2d = lengths.astype(jnp.int32).reshape(1, B)

    # --- batch tiling: B lives on the lane axis, so tiles must be 128-wide or
    # cover the full batch.  >= 2 tiles feeds both v7x TensorCores.
    if b_tile is None:
        b_tile = 128 if (B >= 256 and B % 128 == 0) else B
    if b_tile != B and (b_tile % 128 != 0 or B % b_tile != 0):
        raise ValueError("b_tile must equal B or be a 128-multiple dividing B "
                         f"(batch sits on the lane axis); got b_tile={b_tile}, B={B}")

    in_bytes = jnp.dtype(k_tkb.dtype).itemsize
    out_dtype = v_tdb.dtype
    out_bytes = jnp.dtype(out_dtype).itemsize

    # --- generation-aware T tiling / VMEM limit ------------------------------
    cap = _vmem_capacity_bytes()
    budget = max(cap - (16 << 20), 16 << 20)     # headroom for Mosaic scratch
    if t_tile is None:
        # Large tiles amortize per-step pipeline overhead on 128 MiB parts
        # (v5e/v6e); stay near 64 rows on 64 MiB parts (v7x).
        t_tile = 256 if cap >= (96 << 20) else 64
    t_tile = max(8, min(_round_up(t_tile, 8), _round_up(T, 8)))
    while (t_tile > 8 and
           _vmem_block_bytes(t_tile, K, D, b_tile, in_bytes, out_bytes) > budget):
        t_tile = max(8, _round_up(t_tile // 2, 8))
    est = _vmem_block_bytes(t_tile, K, D, b_tile, in_bytes, out_bytes)
    vmem_limit = int(max(32 << 20, min(cap - (8 << 20), est + (32 << 20))))

    n_b = pl.cdiv(B, b_tile)
    n_t = pl.cdiv(T, t_tile)   # ragged tail handled by the in-kernel mask

    cost = pl.CostEstimate(
        flops=2 * T * B * (K + D),
        transcendentals=T * B,
        bytes_accessed=in_bytes * (T * B * (K + D) + K * B) + out_bytes * B * D + 4 * B,
    )

    out_db = pl.pallas_call(
        _attn_kernel,
        out_shape=jax.ShapeDtypeStruct((D, B), out_dtype),
        grid_spec=pltpu.PrefetchScalarGridSpec(
            num_scalar_prefetch=0,
            grid=(n_b, n_t),   # (batch tiles: parallel, T tiles: reduction)
            in_specs=[
                pl.BlockSpec((1, b_tile), lambda b, t: (0, b)),              # lengths
                pl.BlockSpec((K, b_tile), lambda b, t: (0, b)),              # query
                pl.BlockSpec((t_tile, K, b_tile), lambda b, t: (t, 0, b)),   # key
                pl.BlockSpec((t_tile, D, b_tile), lambda b, t: (t, 0, b)),   # value
            ],
            out_specs=pl.BlockSpec((D, b_tile), lambda b, t: (0, b)),
            scratch_shapes=[
                pltpu.VMEM((1, b_tile), jnp.float32),      # running max m
                pltpu.VMEM((1, b_tile), jnp.float32),      # running denom l
                pltpu.VMEM((D, b_tile), jnp.float32),      # running accumulator
            ],
        ),
        compiler_params=pltpu.CompilerParams(
            dimension_semantics=("parallel", "arbitrary"),
            vmem_limit_bytes=vmem_limit,
        ),
        cost_estimate=cost,
    )(lens_2d, q_kb, k_tkb, v_tdb)

    return out_db.T   # tiny (D, B) -> (B, D) transpose in the wrapper


def _reference_f32(query, key, value, lengths):
    """Plain-JAX mirror of GlobalSoftAttention.forward, full f32 math.

    Elementwise multiply + sum (not einsum) so XLA cannot lower the score to a
    reduced-precision MXU dot on TPU.
    """
    q = query.astype(jnp.float32)
    k = key.astype(jnp.float32)
    v = value.astype(jnp.float32)
    T = k.shape[0]
    mask = jnp.arange(T)[:, None] < lengths[None, :]
    e = jnp.sum(q[None, :, :] * k, axis=-1)
    e = jnp.where(mask, e, -jnp.inf)
    a = jax.nn.softmax(e, axis=0)
    return jnp.sum(a[:, :, None] * v, axis=0)


def _reference_lowp(query, key, value, lengths):
    """Reference mirroring the kernel's mixed-precision contract: multiplies in
    the input dtype (e.g. bf16), softmax and accumulation in f32."""
    T = key.shape[0]
    mask = jnp.arange(T)[:, None] < lengths[None, :]
    e = jnp.sum((query[None, :, :] * key).astype(jnp.float32), axis=-1)
    e = jnp.where(mask, e, -jnp.inf)
    a = jax.nn.softmax(e, axis=0)
    out = jnp.sum((a.astype(value.dtype)[:, :, None] * value).astype(jnp.float32),
                  axis=0)
    return out


if __name__ == "__main__":
    root = jax.random.PRNGKey(0)
    k1, k2, k3, k4, k5, k6, k7, k8 = jax.random.split(root, 8)

    # --- run 1: float32, canonical (T, B, K) inputs.  B = 256 -> two
    # lane-dense batch tiles (the v7x dual-TC 'parallel' axis), t_tile = 16
    # does not divide T = 50 (ragged T tail), K/D are not 128-multiples (no
    # wrapper padding anywhere).
    T, B, K, D = 50, 256, 40, 24
    query = jax.random.normal(k1, (B, K), dtype=jnp.float32)
    key = jax.random.normal(k2, (T, B, K), dtype=jnp.float32)
    value = jax.random.normal(k3, (T, B, D), dtype=jnp.float32)
    lengths = jax.random.randint(k4, (B,), 1, T + 1)

    out = global_soft_attention(query, key, value, lengths, t_tile=16)
    out = jax.block_until_ready(out)
    ref = _reference_f32(query, key, value, lengths)
    assert out.shape == (B, D) and out.dtype == value.dtype
    err = float(jnp.max(jnp.abs(out.astype(jnp.float32) - ref)))
    assert err < 3e-4, f"float32 mismatch vs reference: {err}"

    # --- run 2: bfloat16 streaming with pre-transposed (batch-minor) inputs,
    # i.e. the kernel-native layout a decoder loop would reuse every step.
    # Checked against a reference that mirrors the kernel's mixed-precision
    # contract (bf16 multiplies, f32 softmax/accumulation); remaining
    # differences are bf16 weight/output rounding, hence the looser tolerance.
    T2, B2, K2, D2 = 48, 24, 32, 40
    q2 = jax.random.normal(k5, (B2, K2), dtype=jnp.bfloat16)
    key2 = jax.random.normal(k6, (T2, B2, K2), dtype=jnp.bfloat16)
    val2 = jax.random.normal(k7, (T2, B2, D2), dtype=jnp.bfloat16)
    len2 = jax.random.randint(k8, (B2,), 1, T2 + 1)

    out2 = global_soft_attention(
        q2.T,
        jnp.transpose(key2, (0, 2, 1)),
        jnp.transpose(val2, (0, 2, 1)),
        len2,
        t_tile=24,
        inputs_transposed=True,
    )
    out2 = jax.block_until_ready(out2)
    ref2 = _reference_lowp(q2, key2, val2, len2)
    assert out2.shape == (B2, D2) and out2.dtype == val2.dtype
    err2 = float(jnp.max(jnp.abs(out2.astype(jnp.float32) - ref2)))
    assert err2 < 5e-2, f"bfloat16 mismatch vs reference: {err2}"

    print("KERNEL_OK")
</pallas_src>

<mosaic_0001>
module attributes {stable_mosaic.version = 11 : i64} {
  func.func @_attn_kernel(%arg0: i32, %arg1: i32, %arg2: memref<1x128xi32, #tpu.memory_space<vmem>>, %arg3: memref<40x128xf32, #tpu.memory_space<vmem>>, %arg4: memref<16x40x128xf32, #tpu.memory_space<vmem>>, %arg5: memref<16x24x128xf32, #tpu.memory_space<vmem>>, %arg6: memref<24x128xf32, #tpu.memory_space<vmem>>, %arg7: memref<1x128xf32, #tpu.memory_space<vmem>>, %arg8: memref<1x128xf32, #tpu.memory_space<vmem>>, %arg9: memref<24x128xf32, #tpu.memory_space<vmem>>) attributes {dimension_semantics = [#tpu.dimension_semantics<parallel>, #tpu.dimension_semantics<arbitrary>], iteration_bounds = array<i64: 2, 4>, scalar_prefetch = 0 : i64, scratch_operands = 3 : i64, tpu.core_type = #tpu.core_type<tc>, window_params = [{transform_indices = @transform_0, window_bounds = array<i64: 1, 128>}, {transform_indices = @transform_1, window_bounds = array<i64: 40, 128>}, {transform_indices = @transform_2, window_bounds = array<i64: 16, 40, 128>}, {transform_indices = @transform_3, window_bounds = array<i64: 16, 24, 128>}, {transform_indices = @transform_4, window_bounds = array<i64: 24, 128>}]} {
    %c0_i32 = arith.constant 0 : i32
    %0 = arith.cmpi eq, %arg1, %c0_i32 : i32
    %1 = arith.extui %0 : i1 to i32
    %c0_i32_0 = arith.constant 0 : i32
    %2 = arith.cmpi ne, %1, %c0_i32_0 : i32
    scf.if %2 {
      %cst_29 = arith.constant -1.000000e+30 : f32
      %55 = vector.broadcast %cst_29 : f32 to vector<1x128xf32>
      %c0_30 = arith.constant 0 : index
      %c0_31 = arith.constant 0 : index
      %56 = vector.load %arg7[%c0_30, %c0_31] : memref<1x128xf32, #tpu.memory_space<vmem>>, vector<1x128xf32>
      tpu.vector_store %arg7[%c0_30, %c0_31], %55 {strides = array<i32>} : memref<1x128xf32, #tpu.memory_space<vmem>>, vector<1x128xf32>,
      %cst_32 = arith.constant 0.000000e+00 : f32
      %57 = vector.broadcast %cst_32 : f32 to vector<1x128xf32>
      %c0_33 = arith.constant 0 : index
      %c0_34 = arith.constant 0 : index
      %58 = vector.load %arg8[%c0_33, %c0_34] : memref<1x128xf32, #tpu.memory_space<vmem>>, vector<1x128xf32>
      tpu.vector_store %arg8[%c0_33, %c0_34], %57 {strides = array<i32>} : memref<1x128xf32, #tpu.memory_space<vmem>>, vector<1x128xf32>,
      %cst_35 = arith.constant 0.000000e+00 : f32
      %59 = vector.broadcast %cst_35 : f32 to vector<24x128xf32>
      %c0_36 = arith.constant 0 : index
      %c0_37 = arith.constant 0 : index
      %60 = vector.load %arg9[%c0_36, %c0_37] : memref<24x128xf32, #tpu.memory_space<vmem>>, vector<24x128xf32>
      tpu.vector_store %arg9[%c0_36, %c0_37], %59 {strides = array<i32>} : memref<24x128xf32, #tpu.memory_space<vmem>>, vector<24x128xf32>,
    } else {
    }
    %c0 = arith.constant 0 : index
    %c0_1 = arith.constant 0 : index
    %3 = vector.load %arg3[%c0, %c0_1] : memref<40x128xf32, #tpu.memory_space<vmem>>, vector<40x128xf32>
    %c0_2 = arith.constant 0 : index
    %c0_3 = arith.constant 0 : index
    %c0_4 = arith.constant 0 : index
    %4 = vector.load %arg4[%c0_2, %c0_3, %c0_4] : memref<16x40x128xf32, #tpu.memory_space<vmem>>, vector<16x40x128xf32>
    %5 = vector.shape_cast %3 : vector<40x128xf32> to vector<1x40x128xf32>
    %6 = vector.broadcast %5 : vector<1x40x128xf32> to vector<16x40x128xf32>
    %7 = arith.mulf %4, %6 : vector<16x40x128xf32>
    %cst = arith.constant dense<0.000000e+00> : vector<16x128xf32>
    %8 = vector.multi_reduction <add>, %7, %cst [1] : vector<16x40x128xf32> to vector<16x128xf32>
    %9 = tpu.iota {dimensions = array<i32: 0>} : vector<16x128xi32>
    %c16_i32 = arith.constant 16 : i32
    %10 = arith.muli %arg1, %c16_i32 : i32
    %11 = vector.broadcast %10 : i32 to vector<16x128xi32>
    %12 = arith.addi %9, %11 : vector<16x128xi32>
    %c0_5 = arith.constant 0 : index
    %c0_6 = arith.constant 0 : index
    %13 = vector.load %arg2[%c0_5, %c0_6] : memref<1x128xi32, #tpu.memory_space<vmem>>, vector<1x128xi32>
    %14 = vector.broadcast %13 : vector<1x128xi32> to vector<16x128xi32>
    %15 = arith.cmpi slt, %12, %14 : vector<16x128xi32>
    %cst_7 = arith.constant -1.000000e+30 : f32
    %16 = vector.broadcast %cst_7 : f32 to vector<16x128xf32>
    %17 = arith.select %15, %8, %16 : vector<16x128xi1>, vector<16x128xf32>
    %c0_8 = arith.constant 0 : index
    %c0_9 = arith.constant 0 : index
    %18 = vector.load %arg7[%c0_8, %c0_9] : memref<1x128xf32, #tpu.memory_space<vmem>>, vector<1x128xf32>
    %cst_10 = arith.constant dense<0xFF800000> : vector<128xf32>
    %19 = vector.multi_reduction <maximumf>, %17, %cst_10 [0] : vector<16x128xf32> to vector<128xf32>
    %20 = vector.shape_cast %19 : vector<128xf32> to vector<1x128xf32>
    %21 = arith.maximumf %18, %20 : vector<1x128xf32>
    %22 = arith.subf %18, %21 : vector<1x128xf32>
    %23 = math.exp %22 : vector<1x128xf32>
    %24 = vector.broadcast %21 : vector<1x128xf32> to vector<16x128xf32>
    %25 = arith.subf %17, %24 : vector<16x128xf32>
    %26 = math.exp %25 : vector<16x128xf32>
    %cst_11 = arith.constant 0.000000e+00 : f32
    %27 = vector.broadcast %cst_11 : f32 to vector<16x128xf32>
    %28 = arith.select %15, %26, %27 : vector<16x128xi1>, vector<16x128xf32>
    %c0_12 = arith.constant 0 : index
    %c0_13 = arith.constant 0 : index
    %29 = vector.load %arg8[%c0_12, %c0_13] : memref<1x128xf32, #tpu.memory_space<vmem>>, vector<1x128xf32>
    %30 = arith.mulf %23, %29 : vector<1x128xf32>
    %cst_14 = arith.constant dense<0.000000e+00> : vector<128xf32>
    %31 = vector.multi_reduction <add>, %28, %cst_14 [0] : vector<16x128xf32> to vector<128xf32>
    %32 = vector.shape_cast %31 : vector<128xf32> to vector<1x128xf32>
    %33 = arith.addf %30, %32 : vector<1x128xf32>
    %c0_15 = arith.constant 0 : index
    %c0_16 = arith.constant 0 : index
    %34 = vector.load %arg8[%c0_15, %c0_16] : memref<1x128xf32, #tpu.memory_space<vmem>>, vector<1x128xf32>
    tpu.vector_store %arg8[%c0_15, %c0_16], %33 {strides = array<i32>} : memref<1x128xf32, #tpu.memory_space<vmem>>, vector<1x128xf32>,
    %c0_17 = arith.constant 0 : index
    %c0_18 = arith.constant 0 : index
    %35 = vector.load %arg7[%c0_17, %c0_18] : memref<1x128xf32, #tpu.memory_space<vmem>>, vector<1x128xf32>
    tpu.vector_store %arg7[%c0_17, %c0_18], %21 {strides = array<i32>} : memref<1x128xf32, #tpu.memory_space<vmem>>, vector<1x128xf32>,
    %36 = vector.shape_cast %15 : vector<16x128xi1> to vector<16x1x128xi1>
    %c0_19 = arith.constant 0 : index
    %c0_20 = arith.constant 0 : index
    %c0_21 = arith.constant 0 : index
    %37 = vector.load %arg5[%c0_19, %c0_20, %c0_21] : memref<16x24x128xf32, #tpu.memory_space<vmem>>, vector<16x24x128xf32>
    %c0_i32_22 = arith.constant 0 : i32
    %38 = arith.sitofp %c0_i32_22 : i32 to f32
    %39 = vector.shape_cast %36 : vector<16x1x128xi1> to vector<16x1x128xi1>
    %40 = vector.broadcast %39 : vector<16x1x128xi1> to vector<16x24x128xi1>
    %41 = vector.broadcast %38 : f32 to vector<16x24x128xf32>
    %42 = arith.select %40, %37, %41 : vector<16x24x128xi1>, vector<16x24x128xf32>
    %43 = vector.shape_cast %28 : vector<16x128xf32> to vector<16x1x128xf32>
    %44 = vector.broadcast %43 : vector<16x1x128xf32> to vector<16x24x128xf32>
    %45 = arith.mulf %44, %42 : vector<16x24x128xf32>
    %cst_23 = arith.constant dense<0.000000e+00> : vector<24x128xf32>
    %46 = vector.multi_reduction <add>, %45, %cst_23 [0] : vector<16x24x128xf32> to vector<24x128xf32>
    %c0_24 = arith.constant 0 : index
    %c0_25 = arith.constant 0 : index
    %47 = vector.load %arg9[%c0_24, %c0_25] : memref<24x128xf32, #tpu.memory_space<vmem>>, vector<24x128xf32>
    %48 = vector.broadcast %23 : vector<1x128xf32> to vector<24x128xf32>
    %49 = arith.mulf %48, %47 : vector<24x128xf32>
    %50 = arith.addf %49, %46 : vector<24x128xf32>
    %c0_26 = arith.constant 0 : index
    %c0_27 = arith.constant 0 : index
    %51 = vector.load %arg9[%c0_26, %c0_27] : memref<24x128xf32, #tpu.memory_space<vmem>>, vector<24x128xf32>
    tpu.vector_store %arg9[%c0_26, %c0_27], %50 {strides = array<i32>} : memref<24x128xf32, #tpu.memory_space<vmem>>, vector<24x128xf32>,
    %c3_i32 = arith.constant 3 : i32
    %52 = arith.cmpi eq, %arg1, %c3_i32 : i32
    %53 = arith.extui %52 : i1 to i32
    %c0_i32_28 = arith.constant 0 : i32
    %54 = arith.cmpi ne, %53, %c0_i32_28 : i32
    scf.if %54 {
      %c0_29 = arith.constant 0 : index
      %c0_30 = arith.constant 0 : index
      %55 = vector.load %arg8[%c0_29, %c0_30] : memref<1x128xf32, #tpu.memory_space<vmem>>, vector<1x128xf32>
      %cst_31 = arith.constant 1.000000e-30 : f32
      %56 = vector.broadcast %cst_31 : f32 to vector<1x128xf32>
      %57 = arith.maximumf %55, %56 : vector<1x128xf32>
      %58 = tpu.reciprocal %57 {approx = true} : vector<1x128xf32> -> vector<1x128xf32>
      %59 = arith.mulf %57, %58 : vector<1x128xf32>
      %cst_32 = arith.constant 2.000000e+00 : f32
      %60 = vector.broadcast %cst_32 : f32 to vector<1x128xf32>
      %61 = arith.subf %60, %59 : vector<1x128xf32>
      %62 = arith.mulf %58, %61 : vector<1x128xf32>
      %c0_33 = arith.constant 0 : index
      %c0_34 = arith.constant 0 : index
      %63 = vector.load %arg9[%c0_33, %c0_34] : memref<24x128xf32, #tpu.memory_space<vmem>>, vector<24x128xf32>
      %64 = vector.broadcast %62 : vector<1x128xf32> to vector<24x128xf32>
      %65 = arith.mulf %63, %64 : vector<24x128xf32>
      %c0_35 = arith.constant 0 : index
      %c0_36 = arith.constant 0 : index
      %66 = vector.load %arg6[%c0_35, %c0_36] : memref<24x128xf32, #tpu.memory_space<vmem>>, vector<24x128xf32>
      tpu.vector_store %arg6[%c0_35, %c0_36], %65 {strides = array<i32>} : memref<24x128xf32, #tpu.memory_space<vmem>>, vector<24x128xf32>,
    } else {
    }
    return
  }
  func.func @transform_0(%arg0: i32, %arg1: i32) -> (i32, i32) {
    %c0_i32 = arith.constant 0 : i32
    %c0_i32_0 = arith.constant 0 : i32
    return %c0_i32, %arg0 : i32, i32
  }
  func.func @transform_1(%arg0: i32, %arg1: i32) -> (i32, i32) {
    %c0_i32 = arith.constant 0 : i32
    %c0_i32_0 = arith.constant 0 : i32
    return %c0_i32, %arg0 : i32, i32
  }
  func.func @transform_2(%arg0: i32, %arg1: i32) -> (i32, i32, i32) {
    %c0_i32 = arith.constant 0 : i32
    %c0_i32_0 = arith.constant 0 : i32
    return %arg1, %c0_i32, %arg0 : i32, i32, i32
  }
  func.func @transform_3(%arg0: i32, %arg1: i32) -> (i32, i32, i32) {
    %c0_i32 = arith.constant 0 : i32
    %c0_i32_0 = arith.constant 0 : i32
    return %arg1, %c0_i32, %arg0 : i32, i32, i32
  }
  func.func @transform_4(%arg0: i32, %arg1: i32) -> (i32, i32) {
    %c0_i32 = arith.constant 0 : i32
    %c0_i32_0 = arith.constant 0 : i32
    return %c0_i32, %arg0 : i32, i32
  }
}

</mosaic_0001>

<llo_original>
// kernel: tpu_custom_call.1
$region0: #{tpu_custom_call.1}
  #allocation0 [shape = 'u32[]', space=smem, size = 0x4, offset = 0x4, fixed_abs, tag = 'smem constant byte address 0x4 - core index']
  #allocation1 [shape = 'u32[72,128]{1,0:T(1,128)}', space=vmem, size = 0x9000, scoped, tag = 'internal scratch']
  #allocation2 [shape = 'f32[1,128]{1,0:T(1,128)}', space=vmem, size = 0x200, scoped, tag = 'scratch operand']
  #allocation3 [shape = 'f32[1,128]{1,0:T(1,128)}', space=vmem, size = 0x200, scoped, tag = 'scratch operand']
  #allocation4 [shape = 'f32[24,128]{1,0:T(8,128)}', space=vmem, size = 0x3000, scoped, tag = 'scratch operand']
  %s0 = inlined_call_operand.hbm [shape: s32[1,256], index: 0, kind: input, shape index: {}]
  %s1 = inlined_call_operand.hbm [shape: f32[40,256], index: 1, kind: input, shape index: {}]
  %s2 = inlined_call_operand.hbm [shape: f32[50,40,256], index: 2, kind: input, shape index: {}]
  %s3 = inlined_call_operand.hbm [shape: f32[50,24,256], index: 3, kind: input, shape index: {}]
  %s4 = inlined_call_operand.hbm [shape: f32[24,256], index: 4, kind: output, shape index: {}]
  %s5 = sld [smem:[#allocation0]]
  $region73: #{tpu_custom_call.1} parent=0
    _
  %s7 = ssub.s32 1, %s5
  %s8 = scalar_select 0, %s7, %s5
  $region1: #{tpu_custom_call.1} parent=0
    #allocation5 [shape = 'u8[1024]{0}', space=vmem, size = 0x400, scoped, tag = 'input window, operand 0']
    #allocation6 [shape = 's32[2]{0}', space=sflag, size = 0x8, scoped, tag = 'scoped memory for tpu_custom_call.1']
    #allocation7 [shape = 's32[2]{0}', space=sflag, size = 0x8, scoped, tag = 'scoped memory for tpu_custom_call.1']
    #allocation8 [shape = 'u8[40960]{0}', space=vmem, size = 0xa000, scoped, tag = 'input window, operand 1']
    #allocation9 [shape = 's32[2]{0}', space=sflag, size = 0x8, scoped, tag = 'scoped memory for tpu_custom_call.1']
    #allocation10 [shape = 'u8[655360]{0}', space=vmem, size = 0xa0000, scoped, tag = 'input window, operand 2']
    #allocation11 [shape = 'u8[393216]{0}', space=vmem, size = 0x60000, scoped, tag = 'input window, operand 3']
    #allocation12 [shape = 's32[2]{0}', space=sflag, size = 0x8, scoped, tag = 'scoped memory for tpu_custom_call.1']
    #allocation13 [shape = 'u8[24576]{0}', space=vmem, size = 0x6000, scoped, tag = 'output window, operand 0']
    %9 = vsyncpa [#allocation6], 0
    %s10 = scalar_lea.sflag [#allocation6], 1
    %11 = vsyncpa %s10, 0
    %12 = vsyncpa [#allocation9], 0
    %s13 = scalar_lea.sflag [#allocation9], 1
    %14 = vsyncpa %s13, 0
    %15 = vsyncpa [#allocation12], 0
    %s16 = scalar_lea.sflag [#allocation12], 1
    %17 = vsyncpa %s16, 0
    %18 = vsyncpa [#allocation7], 0
    %s19 = scalar_lea.sflag [#allocation7], 1
    %20 = vsyncpa %s19, 0
    loop: start=0, step=1, limit=10
    $region2: #{tpu_custom_call.1} parent=1 // loop_pre_header
      _
    $region3: #{tpu_custom_call.1} parent=1 // loop_header
      %s22 = sphi 0, %s26
      %p23 = scmp.ge.s32.totalorder %s22, 10
      %s29 = sphi 0, %s41
      %s30 = sphi 0, %s37
      %s31 = sphi 0, %s29
      %s32 = sphi 0, %s30
      %s33 = sphi 0, %s31
      %s34 = sphi 0, %s32
      %s44 = sphi 0, %s46
      %s47 = sphi 0, %s44
      %s48 = sphi 0, %s47
      %s64 = sphi 0, %s48
      %s70 = sphi 0, %s72
      %s73 = sphi 0, %s70
      %s74 = sphi 0, %s73
      %s90 = sphi 0, %s74
      %s98 = sphi 0, %s100
      %s101 = sphi 0, %s98
      %s102 = sphi 0, %s101
      %s118 = sphi 0, %s102
      %s126 = sphi 0, %s128
      %s129 = sphi 0, %s126
      %s130 = sphi 0, %s129
      %s146 = sphi 0, %s130
      %s152 = sphi 0, %s154
      %s155 = sphi 0, %s152
      %s156 = sphi 0, %s155
      %s172 = sphi 0, %s156
    $region4: #{tpu_custom_call.1} parent=1 // loop_header_branch
      %25 = sbr.rel (%p23) target = $region8
    $region5: #{tpu_custom_call.1} parent=1 // loop_body
      %s27 = ssub.s32 %s22, 1
      %s28 = ssub.s32 %s22, 2
      %s35 = sadd.s32 1, %s30
      %p36 = scmp.ge.s32.totalorder %s35, 4
      %s37 = scalar_select %p36, 0, %s35
      %s38 = sadd.s32 1, %s29
      %s39 = scalar_select %p36, %s38, %s29
      %p40 = scmp.ge.s32.totalorder %s39, 2
      %s41 = scalar_select %p40, 0, %s39
      %s42 = ssub.s32 %s29, %s41
      %p43 = scmp.eq.s32.totalorder %s42, 0
      %s45 = sadd.s32 %s44, 1
      %s46 = scalar_select %p43, %s44, %s45
      %p49 = pneg %p43
      %p50 = scmp.eq.s32.totalorder %s22, 7
      %p51 = por %p49, %p50
      %p52 = scmp.ne.s32.totalorder %s44, %s47
      %p53 = scmp.eq.s32.totalorder %s22, 0
      %p54 = por %p52, %p53
      %p55 = scmp.ne.s32.totalorder %s44, %s47
      %p56 = scmp.eq.s32.totalorder %s27, 7
      %p57 = por %p55, %p56
      %p58 = scmp.ne.s32.totalorder %s47, %s48
      %p59 = scmp.eq.s32.totalorder %s27, 0
      %p60 = por %p58, %p59
      %p61 = scmp.ne.s32.totalorder %s47, %s48
      %p62 = scmp.eq.s32.totalorder %s28, 7
      %p63 = por %p61, %p62
      %p65 = scmp.ne.s32.totalorder %s48, %s64
      %p66 = scmp.eq.s32.totalorder %s28, 0
      %p67 = por %p65, %p66
      %s68 = ssub.s32 %s29, %s41
      %p69 = scmp.eq.s32.totalorder %s68, 0
      %s71 = sadd.s32 %s70, 1
      %s72 = scalar_select %p69, %s70, %s71
      %p75 = pneg %p69
      %p76 = scmp.eq.s32.totalorder %s22, 7
      %p77 = por %p75, %p76
      %p78 = scmp.ne.s32.totalorder %s70, %s73
      %p79 = scmp.eq.s32.totalorder %s22, 0
      %p80 = por %p78, %p79
      %p81 = scmp.ne.s32.totalorder %s70, %s73
      %p82 = scmp.eq.s32.totalorder %s27, 7
      %p83 = por %p81, %p82
      %p84 = scmp.ne.s32.totalorder %s73, %s74
      %p85 = scmp.eq.s32.totalorder %s27, 0
      %p86 = por %p84, %p85
      %p87 = scmp.ne.s32.totalorder %s73, %s74
      %p88 = scmp.eq.s32.totalorder %s28, 7
      %p89 = por %p87, %p88
      %p91 = scmp.ne.s32.totalorder %s74, %s90
      %p92 = scmp.eq.s32.totalorder %s28, 0
      %p93 = por %p91, %p92
      %s94 = ssub.s32 %s30, %s37
      %s95 = ssub.s32 %s29, %s41
      %s96 = sor.u32 %s94, %s95
      %p97 = scmp.eq.s32.totalorder %s96, 0
      %s99 = sadd.s32 %s98, 1
      %s100 = scalar_select %p97, %s98, %s99
      %p103 = pneg %p97
      %p104 = scmp.eq.s32.totalorder %s22, 7
      %p105 = por %p103, %p104
      %p106 = scmp.ne.s32.totalorder %s98, %s101
      %p107 = scmp.eq.s32.totalorder %s22, 0
      %p108 = por %p106, %p107
      %p109 = scmp.ne.s32.totalorder %s98, %s101
      %p110 = scmp.eq.s32.totalorder %s27, 7
      %p111 = por %p109, %p110
      %p112 = scmp.ne.s32.totalorder %s101, %s102
      %p113 = scmp.eq.s32.totalorder %s27, 0
      %p114 = por %p112, %p113
      %p115 = scmp.ne.s32.totalorder %s101, %s102
      %p116 = scmp.eq.s32.totalorder %s28, 7
      %p117 = por %p115, %p116
      %p119 = scmp.ne.s32.totalorder %s102, %s118
      %p120 = scmp.eq.s32.totalorder %s28, 0
      %p121 = por %p119, %p120
      %s122 = ssub.s32 %s30, %s37
      %s123 = ssub.s32 %s29, %s41
      %s124 = sor.u32 %s122, %s123
      %p125 = scmp.eq.s32.totalorder %s124, 0
      %s127 = sadd.s32 %s126, 1
      %s128 = scalar_select %p125, %s126, %s127
      %p131 = pneg %p125
      %p132 = scmp.eq.s32.totalorder %s22, 7
      %p133 = por %p131, %p132
      %p134 = scmp.ne.s32.totalorder %s126, %s129
      %p135 = scmp.eq.s32.totalorder %s22, 0
      %p136 = por %p134, %p135
      %p137 = scmp.ne.s32.totalorder %s126, %s129
      %p138 = scmp.eq.s32.totalorder %s27, 7
      %p139 = por %p137, %p138
      %p140 = scmp.ne.s32.totalorder %s129, %s130
      %p141 = scmp.eq.s32.totalorder %s27, 0
      %p142 = por %p140, %p141
      %p143 = scmp.ne.s32.totalorder %s129, %s130
      %p144 = scmp.eq.s32.totalorder %s28, 7
      %p145 = por %p143, %p144
      %p147 = scmp.ne.s32.totalorder %s130, %s146
      %p148 = scmp.eq.s32.totalorder %s28, 0
      %p149 = por %p147, %p148
      %s150 = ssub.s32 %s29, %s41
      %p151 = scmp.eq.s32.totalorder %s150, 0
      %s153 = sadd.s32 %s152, 1
      %s154 = scalar_select %p151, %s152, %s153
      %p157 = pneg %p151
      %p158 = scmp.eq.s32.totalorder %s22, 7
      %p159 = por %p157, %p158
      %p160 = scmp.ne.s32.totalorder %s152, %s155
      %p161 = scmp.eq.s32.totalorder %s22, 0
      %p162 = por %p160, %p161
      %p163 = scmp.ne.s32.totalorder %s152, %s155
      %p164 = scmp.eq.s32.totalorder %s27, 7
      %p165 = por %p163, %p164
      %p166 = scmp.ne.s32.totalorder %s155, %s156
      %p167 = scmp.eq.s32.totalorder %s27, 0
      %p168 = por %p166, %p167
      %p169 = scmp.ne.s32.totalorder %s155, %s156
      %p170 = scmp.eq.s32.totalorder %s28, 7
      %p171 = por %p169, %p170
      %p173 = scmp.ne.s32.totalorder %s156, %s172
      %p174 = scmp.eq.s32.totalorder %s28, 0
      %p175 = por %p173, %p174
      %p176 = scmp.le.s32.totalorder 1, %s22
      %p177 = scmp.lt.s32.totalorder %s22, 9
      %p178 = pnand %p176, %p177
      %p179 = pneg %p178
      // Predicated region
      $region9: #{tpu_custom_call.1} parent=5 // pred_check
        _
      $region10: #{tpu_custom_call.1} parent=5 // pred_check_branch
        %181 = sbr.rel (%p178) target = $region12
      $region11: #{tpu_custom_call.1} parent=5 // pred_region
        %s182 = ssub.s32 %s22, 1
      $region12: #{tpu_custom_call.1} parent=5 // pred_fallthru
        _
      %p183 = scmp.lt.s32.totalorder %s22, 8
      // Predicated region
      $region13: #{tpu_custom_call.1} parent=5 // pred_check
        %p184 = pneg %p183
      $region14: #{tpu_custom_call.1} parent=5 // pred_check_branch
        %186 = sbr.rel (%p184) target = $region16
      $region15: #{tpu_custom_call.1} parent=5 // pred_region
        // Predicated region
        $region17: #{tpu_custom_call.1} parent=15 // pred_check
          %p187 = pneg %p54
        $region18: #{tpu_custom_call.1} parent=15 // pred_check_branch
          %189 = sbr.rel (%p187) target = $region20
        $region19: #{tpu_custom_call.1} parent=15 // pred_region
          %s190 = sand.u32 %s44, 1
          %s191 = scalar_lea.sflag [#allocation6], %s190
          %s192 = sand.u32 %s44, 1
          %s193 = scalar_lea.vmem [#allocation5], %s192
          %195 = vsyncadd %s191, 0
          %s196 = scalar_lea.hbm %s0, %s29
          %s198 = sshll.u32 %s196, 4
          %s199 = int_to_ptr.hbm [resolvable:$true] %s198
          %s200 = sshll.u32 %s193, 4
          %s201 = int_to_ptr.vmem [resolvable:$true] %s200
          %203 = dma.hbm_to_vmem [thread:$0]  %s199, 16, %s201, %s191
        $region20: #{tpu_custom_call.1} parent=15 // pred_fallthru
          _
        // Predicated region
        $region21: #{tpu_custom_call.1} parent=15 // pred_check
          %p204 = pneg %p80
        $region22: #{tpu_custom_call.1} parent=15 // pred_check_branch
          %206 = sbr.rel (%p204) target = $region24
        $region23: #{tpu_custom_call.1} parent=15 // pred_region
          %s207 = sand.u32 %s22, 1
          %s208 = scalar_lea.sflag [#allocation9], %s207
          %s209 = sand.u32 %s70, 1
          %s210 = smul.addr %s209, 40
          %s211 = scalar_lea.vmem [#allocation8], %s210
          %213 = vsyncadd %s208, 0
          %s214 = smul.addr %s29, 8
          %s215 = scalar_lea.hbm %s1, %s214
          %s216 = sshll.u32 %s215, 4
          %s217 = int_to_ptr.hbm [resolvable:$true] %s216
          %s218 = sshll.u32 %s211, 4
          %s219 = int_to_ptr.vmem [resolvable:$true] %s218
          %224 = dma.hbm_to_vmem [thread:$0]  %s217, 640, %s219, %s208, 256, 128, 8
        $region24: #{tpu_custom_call.1} parent=15 // pred_fallthru
          _
        // Predicated region
        $region25: #{tpu_custom_call.1} parent=15 // pred_check
          %p225 = pneg %p108
        $region26: #{tpu_custom_call.1} parent=15 // pred_check_branch
          %227 = sbr.rel (%p225) target = $region28
        $region27: #{tpu_custom_call.1} parent=15 // pred_region
          %s228 = sand.u32 %s22, 1
          %s229 = scalar_lea.sflag [#allocation9], %s228
          %s230 = sand.u32 %s98, 1
          %s231 = smul.addr %s230, 640
          %s232 = scalar_lea.vmem [#allocation10], %s231
          %s233 = smul.u32 16, %s30
          %s234 = ssub.s32 50, %s233
          %p235 = scmp.lt.s32.totalorder %s234, 16
          %s236 = scalar_select %p235, %s234, 16
          %s237 = smul.u32 8, %s236
          %s238 = smul.u32 %s237, 5
          %s239 = ssub.s32 640, %s238
          %s240 = sshll.u32 %s239, 4
          %241 = vsyncadd %s229, %s240
          %p242 = scmp.ne.s32.totalorder 0, %s238
          %s243 = smul.addr %s233, 10
          %s244 = sadd.s32 %s29, %s243
          %s245 = smul.addr %s244, 8
          %s246 = scalar_lea.hbm %s2, %s245
          %s247 = smul.u32 %s236, 5
          %s248 = smul.u32 8, %s247
          %s249 = sshll.u32 %s246, 4
          %s250 = int_to_ptr.hbm [resolvable:$true] %s249
          %s251 = sshll.u32 %s232, 4
          %s252 = int_to_ptr.vmem [resolvable:$true] %s251
          %s253 = sshll.u32 %s248, 4
          %257 = dma.hbm_to_vmem [thread:$0]  (%p242), %s250, %s253, %s252, %s229, 256, 128, 8
        $region28: #{tpu_custom_call.1} parent=15 // pred_fallthru
          _
        // Predicated region
        $region29: #{tpu_custom_call.1} parent=15 // pred_check
          %p258 = pneg %p136
        $region30: #{tpu_custom_call.1} parent=15 // pred_check_branch
          %260 = sbr.rel (%p258) target = $region32
        $region31: #{tpu_custom_call.1} parent=15 // pred_region
          %s261 = sand.u32 %s126, 1
          %s262 = scalar_lea.sflag [#allocation12], %s261
          %s263 = sand.u32 %s126, 1
          %s264 = smul.addr %s263, 384
          %s265 = scalar_lea.vmem [#allocation11], %s264
          %s266 = smul.u32 16, %s30
          %s267 = ssub.s32 50, %s266
          %p268 = scmp.lt.s32.totalorder %s267, 16
          %s269 = scalar_select %p268, %s267, 16
          %s270 = smul.u32 8, %s269
          %s271 = smul.u32 %s270, 3
          %s272 = ssub.s32 384, %s271
          %s273 = sshll.u32 %s272, 4
          %274 = vsyncadd %s262, %s273
          %p275 = scmp.ne.s32.totalorder 0, %s271
          %s276 = smul.addr %s266, 6
          %s277 = sadd.s32 %s29, %s276
          %s278 = smul.addr %s277, 8
          %s279 = scalar_lea.hbm %s3, %s278
          %s280 = smul.u32 %s269, 3
          %s281 = smul.u32 8, %s280
          %s282 = sshll.u32 %s279, 4
          %s283 = int_to_ptr.hbm [resolvable:$true] %s282
          %s284 = sshll.u32 %s265, 4
          %s285 = int_to_ptr.vmem [resolvable:$true] %s284
          %s286 = sshll.u32 %s281, 4
          %290 = dma.hbm_to_vmem [thread:$0]  (%p275), %s283, %s286, %s285, %s262, 256, 128, 8
        $region32: #{tpu_custom_call.1} parent=15 // pred_fallthru
          _
      $region16: #{tpu_custom_call.1} parent=5 // pred_fallthru
        _
      %p291 = scmp.le.s32.totalorder 1, %s22
      %p292 = scmp.lt.s32.totalorder %s22, 9
      %p293 = pnand %p291, %p292
      %p294 = pneg %p293
      // Predicated region
      $region33: #{tpu_custom_call.1} parent=5 // pred_check
        _
      $region34: #{tpu_custom_call.1} parent=5 // pred_check_branch
        %296 = sbr.rel (%p293) target = $region36
      $region35: #{tpu_custom_call.1} parent=5 // pred_region
        %s297 = ssub.s32 %s22, 1
        %s298 = sand.u32 %s47, 1
        %s299 = scalar_lea.sflag [#allocation6], %s298
        %s300 = sand.u32 %s47, 1
        %s301 = scalar_lea.vmem [#allocation5], %s300
        // Predicated region
        $region37: #{tpu_custom_call.1} parent=35 // pred_check
          %p302 = pneg %p60
        $region38: #{tpu_custom_call.1} parent=35 // pred_check_branch
          %304 = sbr.rel (%p302) target = $region40
        $region39: #{tpu_custom_call.1} parent=35 // pred_region
          %306 = dma.done %s299, 16
        $region40: #{tpu_custom_call.1} parent=35 // pred_fallthru
          _
        %s307 = sand.u32 %s27, 1
        %s308 = scalar_lea.sflag [#allocation9], %s307
        %s309 = sand.u32 %s73, 1
        %s310 = smul.addr %s309, 40
        %s311 = scalar_lea.vmem [#allocation8], %s310
        // Predicated region
        $region41: #{tpu_custom_call.1} parent=35 // pred_check
          %p312 = pneg %p86
        $region42: #{tpu_custom_call.1} parent=35 // pred_check_branch
          %314 = sbr.rel (%p312) target = $region44
        $region43: #{tpu_custom_call.1} parent=35 // pred_region
          %316 = dma.done %s308, 640
        $region44: #{tpu_custom_call.1} parent=35 // pred_fallthru
          _
        %s317 = sand.u32 %s27, 1
        %s318 = scalar_lea.sflag [#allocation9], %s317
        %s319 = sand.u32 %s101, 1
        %s320 = smul.addr %s319, 640
        %s321 = scalar_lea.vmem [#allocation10], %s320
        // Predicated region
        $region45: #{tpu_custom_call.1} parent=35 // pred_check
          %p322 = pneg %p114
        $region46: #{tpu_custom_call.1} parent=35 // pred_check_branch
          %324 = sbr.rel (%p322) target = $region48
        $region47: #{tpu_custom_call.1} parent=35 // pred_region
          %326 = dma.done %s318, 10240
        $region48: #{tpu_custom_call.1} parent=35 // pred_fallthru
          _
        %s327 = sand.u32 %s129, 1
        %s328 = scalar_lea.sflag [#allocation12], %s327
        %s329 = sand.u32 %s129, 1
        %s330 = smul.addr %s329, 384
        %s331 = scalar_lea.vmem [#allocation11], %s330
        // Predicated region
        $region49: #{tpu_custom_call.1} parent=35 // pred_check
          %p332 = pneg %p142
        $region50: #{tpu_custom_call.1} parent=35 // pred_check_branch
          %334 = sbr.rel (%p332) target = $region52
        $region51: #{tpu_custom_call.1} parent=35 // pred_region
          %336 = dma.done %s328, 6144
        $region52: #{tpu_custom_call.1} parent=35 // pred_fallthru
          _
        %s337 = sand.u32 %s47, 1
        %s338 = scalar_lea.sflag [#allocation6], %s337
        %s339 = sand.u32 %s47, 1
        %s340 = scalar_lea.vmem [#allocation5], %s339
        %p341 = pneg %p60
        %p342 = pneg %p57
        %s343 = sand.u32 %s27, 1
        %s344 = scalar_lea.sflag [#allocation9], %s343
        %s345 = sand.u32 %s73, 1
        %s346 = smul.addr %s345, 40
        %s347 = scalar_lea.vmem [#allocation8], %s346
        %p348 = pneg %p86
        %p349 = pneg %p83
        %s350 = sand.u32 %s27, 1
        %s351 = scalar_lea.sflag [#allocation9], %s350
        %s352 = sand.u32 %s101, 1
        %s353 = smul.addr %s352, 640
        %s354 = scalar_lea.vmem [#allocation10], %s353
        %p355 = pneg %p114
        %p356 = pneg %p111
        %s357 = sand.u32 %s129, 1
        %s358 = scalar_lea.sflag [#allocation12], %s357
        %s359 = sand.u32 %s129, 1
        %s360 = smul.addr %s359, 384
        %s361 = scalar_lea.vmem [#allocation11], %s360
        %p362 = pneg %p142
        %p363 = pneg %p139
        %p364 = pneg %p168
        %p365 = pneg %p165
        %s366 = sand.u32 %s155, 1
        %s367 = scalar_lea.sflag [#allocation7], %s366
        %s368 = sand.u32 %s155, 1
        %s369 = smul.addr %s368, 24
        %s370 = scalar_lea.vmem [#allocation13], %s369
        %s371 = smul.u32 16, %s32
        %s372 = ssub.s32 50, %s371
        %p373 = scmp.lt.s32.totalorder %s372, 16
        %s374 = scalar_select %p373, %s372, 16
        %s375 = smul.u32 8, %s374
        %s376 = smul.u32 %s375, 5
        %s377 = smul.u32 16, %s32
        %s378 = ssub.s32 50, %s377
        %p379 = scmp.lt.s32.totalorder %s378, 16
        %s380 = scalar_select %p379, %s378, 16
        %s381 = smul.u32 8, %s380
        %s382 = smul.u32 %s381, 3
        %p383 = scmp.eq.s32.totalorder %s32, 0
        // Predicated region
        $region53: #{tpu_custom_call.1} parent=35 // pred_check
          %p384 = pneg %p383
        $region54: #{tpu_custom_call.1} parent=35 // pred_check_branch
          %386 = sbr.rel (%p384) target = $region56
        $region55: #{tpu_custom_call.1} parent=35 // pred_region
          %387 = vst [vmem:[#allocation2] sm:$0x1] -1e+30
          %388 = vst [vmem:[#allocation3] sm:$0x1] 0.0
          %389 = vst [vmem:[#allocation4] sm:$0xff] 0.0
          %390 = vst [vmem:[#allocation4 + $0x8] sm:$0xff] 0.0
          %391 = vst [vmem:[#allocation4 + $0x10] sm:$0xff] 0.0
        $region56: #{tpu_custom_call.1} parent=35 // pred_fallthru
          _
        %v392 = vld [vmem:[%s311] sm:$0xff]
        %v393 = vld [vmem:[%s311 + $0x8] sm:$0xff]
        %v394 = vld [vmem:[%s311 + $0x10] sm:$0xff]
        %v395 = vld [vmem:[%s311 + $0x18] sm:$0xff]
        %v396 = vld [vmem:[%s311 + $0x20] sm:$0xff]
        %v397 = vld [vmem:[%s321] sm:$0xff]
        %v398 = vld [vmem:[%s321 + $0x8] sm:$0xff]
        %v399 = vld [vmem:[%s321 + $0x10] sm:$0xff]
        %v400 = vld [vmem:[%s321 + $0x18] sm:$0xff]
        %v401 = vld [vmem:[%s321 + $0x20] sm:$0xff]
        %v402 = vld [vmem:[%s321 + $0x28] sm:$0xff]
        %v403 = vld [vmem:[%s321 + $0x30] sm:$0xff]
        %v404 = vld [vmem:[%s321 + $0x38] sm:$0xff]
        %v405 = vld [vmem:[%s321 + $0x40] sm:$0xff]
        %v406 = vld [vmem:[%s321 + $0x48] sm:$0xff]
        %v407 = vld [vmem:[%s321 + $0x50] sm:$0xff]
        %v408 = vld [vmem:[%s321 + $0x58] sm:$0xff]
        %v409 = vld [vmem:[%s321 + $0x60] sm:$0xff]
        %v410 = vld [vmem:[%s321 + $0x68] sm:$0xff]
        %v411 = vld [vmem:[%s321 + $0x70] sm:$0xff]
        %v412 = vld [vmem:[%s321 + $0x78] sm:$0xff]
        %v413 = vld [vmem:[%s321 + $0x80] sm:$0xff]
        %v414 = vld [vmem:[%s321 + $0x88] sm:$0xff]
        %v415 = vld [vmem:[%s321 + $0x90] sm:$0xff]
        %v416 = vld [vmem:[%s321 + $0x98] sm:$0xff]
        %v417 = vld [vmem:[%s321 + $0xa0] sm:$0xff]
        %v418 = vld [vmem:[%s321 + $0xa8] sm:$0xff]
        %v419 = vld [vmem:[%s321 + $0xb0] sm:$0xff]
        %v420 = vld [vmem:[%s321 + $0xb8] sm:$0xff]
        %v421 = vld [vmem:[%s321 + $0xc0] sm:$0xff]
        %v422 = vld [vmem:[%s321 + $0xc8] sm:$0xff]
        %v423 = vld [vmem:[%s321 + $0xd0] sm:$0xff]
        %v424 = vld [vmem:[%s321 + $0xd8] sm:$0xff]
        %v425 = vld [vmem:[%s321 + $0xe0] sm:$0xff]
        %v426 = vld [vmem:[%s321 + $0xe8] sm:$0xff]
        %v427 = vld [vmem:[%s321 + $0xf0] sm:$0xff]
        %v428 = vld [vmem:[%s321 + $0xf8] sm:$0xff]
        %v429 = vld [vmem:[%s321 + $0x100] sm:$0xff]
        %v430 = vld [vmem:[%s321 + $0x108] sm:$0xff]
        %v431 = vld [vmem:[%s321 + $0x110] sm:$0xff]
        %v432 = vld [vmem:[%s321 + $0x118] sm:$0xff]
        %v433 = vld [vmem:[%s321 + $0x120] sm:$0xff]
        %v434 = vld [vmem:[%s321 + $0x128] sm:$0xff]
        %v435 = vld [vmem:[%s321 + $0x130] sm:$0xff]
        %v436 = vld [vmem:[%s321 + $0x138] sm:$0xff]
        %v437 = vld [vmem:[%s321 + $0x140] sm:$0xff]
        %v438 = vld [vmem:[%s321 + $0x148] sm:$0xff]
        %v439 = vld [vmem:[%s321 + $0x150] sm:$0xff]
        %v440 = vld [vmem:[%s321 + $0x158] sm:$0xff]
        %v441 = vld [vmem:[%s321 + $0x160] sm:$0xff]
        %v442 = vld [vmem:[%s321 + $0x168] sm:$0xff]
        %v443 = vld [vmem:[%s321 + $0x170] sm:$0xff]
        %v444 = vld [vmem:[%s321 + $0x178] sm:$0xff]
        %v445 = vld [vmem:[%s321 + $0x180] sm:$0xff]
        %v446 = vld [vmem:[%s321 + $0x188] sm:$0xff]
        %v447 = vld [vmem:[%s321 + $0x190] sm:$0xff]
        %v448 = vld [vmem:[%s321 + $0x198] sm:$0xff]
        %v449 = vld [vmem:[%s321 + $0x1a0] sm:$0xff]
        %v450 = vld [vmem:[%s321 + $0x1a8] sm:$0xff]
        %v451 = vld [vmem:[%s321 + $0x1b0] sm:$0xff]
        %v452 = vld [vmem:[%s321 + $0x1b8] sm:$0xff]
        %v453 = vld [vmem:[%s321 + $0x1c0] sm:$0xff]
        %v454 = vld [vmem:[%s321 + $0x1c8] sm:$0xff]
        %v455 = vld [vmem:[%s321 + $0x1d0] sm:$0xff]
        %v456 = vld [vmem:[%s321 + $0x1d8] sm:$0xff]
        %v457 = vld [vmem:[%s321 + $0x1e0] sm:$0xff]
        %v458 = vld [vmem:[%s321 + $0x1e8] sm:$0xff]
        %v459 = vld [vmem:[%s321 + $0x1f0] sm:$0xff]
        %v460 = vld [vmem:[%s321 + $0x1f8] sm:$0xff]
        %v461 = vld [vmem:[%s321 + $0x200] sm:$0xff]
        %v462 = vld [vmem:[%s321 + $0x208] sm:$0xff]
        %v463 = vld [vmem:[%s321 + $0x210] sm:$0xff]
        %v464 = vld [vmem:[%s321 + $0x218] sm:$0xff]
        %v465 = vld [vmem:[%s321 + $0x220] sm:$0xff]
        %v466 = vld [vmem:[%s321 + $0x228] sm:$0xff]
        %v467 = vld [vmem:[%s321 + $0x230] sm:$0xff]
        %v468 = vld [vmem:[%s321 + $0x238] sm:$0xff]
        %v469 = vld [vmem:[%s321 + $0x240] sm:$0xff]
        %v470 = vld [vmem:[%s321 + $0x248] sm:$0xff]
        %v471 = vld [vmem:[%s321 + $0x250] sm:$0xff]
        %v472 = vld [vmem:[%s321 + $0x258] sm:$0xff]
        %v473 = vld [vmem:[%s321 + $0x260] sm:$0xff]
        %v474 = vld [vmem:[%s321 + $0x268] sm:$0xff]
        %v475 = vld [vmem:[%s321 + $0x270] sm:$0xff]
        %v476 = vld [vmem:[%s321 + $0x278] sm:$0xff]
        %v477 = vmul.f32 %v397, %v392
        %v478 = vmul.f32 %v398, %v393
        %v479 = vmul.f32 %v399, %v394
        %v480 = vmul.f32 %v400, %v395
        %v481 = vmul.f32 %v401, %v396
        %v482 = vmul.f32 %v402, %v392
        %v483 = vmul.f32 %v403, %v393
        %v484 = vmul.f32 %v404, %v394
        %v485 = vmul.f32 %v405, %v395
        %v486 = vmul.f32 %v406, %v396
        %v487 = vmul.f32 %v407, %v392
        %v488 = vmul.f32 %v408, %v393
        %v489 = vmul.f32 %v409, %v394
        %v490 = vmul.f32 %v410, %v395
        %v491 = vmul.f32 %v411, %v396
        %v492 = vmul.f32 %v412, %v392
        %v493 = vmul.f32 %v413, %v393
        %v494 = vmul.f32 %v414, %v394
        %v495 = vmul.f32 %v415, %v395
        %v496 = vmul.f32 %v416, %v396
        %v497 = vmul.f32 %v417, %v392
        %v498 = vmul.f32 %v418, %v393
        %v499 = vmul.f32 %v419, %v394
        %v500 = vmul.f32 %v420, %v395
        %v501 = vmul.f32 %v421, %v396
        %v502 = vmul.f32 %v422, %v392
        %v503 = vmul.f32 %v423, %v393
        %v504 = vmul.f32 %v424, %v394
        %v505 = vmul.f32 %v425, %v395
        %v506 = vmul.f32 %v426, %v396
        %v507 = vmul.f32 %v427, %v392
        %v508 = vmul.f32 %v428, %v393
        %v509 = vmul.f32 %v429, %v394
        %v510 = vmul.f32 %v430, %v395
        %v511 = vmul.f32 %v431, %v396
        %v512 = vmul.f32 %v432, %v392
        %v513 = vmul.f32 %v433, %v393
        %v514 = vmul.f32 %v434, %v394
        %v515 = vmul.f32 %v435, %v395
        %v516 = vmul.f32 %v436, %v396
        %v517 = vmul.f32 %v437, %v392
        %v518 = vmul.f32 %v438, %v393
        %v519 = vmul.f32 %v439, %v394
        %v520 = vmul.f32 %v440, %v395
        %v521 = vmul.f32 %v441, %v396
        %v522 = vmul.f32 %v442, %v392
        %v523 = vmul.f32 %v443, %v393
        %v524 = vmul.f32 %v444, %v394
        %v525 = vmul.f32 %v445, %v395
        %v526 = vmul.f32 %v446, %v396
        %v527 = vmul.f32 %v447, %v392
        %v528 = vmul.f32 %v448, %v393
        %v529 = vmul.f32 %v449, %v394
        %v530 = vmul.f32 %v450, %v395
        %v531 = vmul.f32 %v451, %v396
        %v532 = vmul.f32 %v452, %v392
        %v533 = vmul.f32 %v453, %v393
        %v534 = vmul.f32 %v454, %v394
        %v535 = vmul.f32 %v455, %v395
        %v536 = vmul.f32 %v456, %v396
        %v537 = vmul.f32 %v457, %v392
        %v538 = vmul.f32 %v458, %v393
        %v539 = vmul.f32 %v459, %v394
        %v540 = vmul.f32 %v460, %v395
        %v541 = vmul.f32 %v461, %v396
        %v542 = vmul.f32 %v462, %v392
        %v543 = vmul.f32 %v463, %v393
        %v544 = vmul.f32 %v464, %v394
        %v545 = vmul.f32 %v465, %v395
        %v546 = vmul.f32 %v466, %v396
        %v547 = vmul.f32 %v467, %v392
        %v548 = vmul.f32 %v468, %v393
        %v549 = vmul.f32 %v469, %v394
        %v550 = vmul.f32 %v470, %v395
        %v551 = vmul.f32 %v471, %v396
        %v552 = vmul.f32 %v472, %v392
        %v553 = vmul.f32 %v473, %v393
        %v554 = vmul.f32 %v474, %v394
        %v555 = vmul.f32 %v475, %v395
        %v556 = vmul.f32 %v476, %v396
        %v557 = vadd.f32 %v477, %v478
        %v558 = vadd.f32 %v557, %v479
        %v559 = vadd.f32 %v558, %v480
        %v560 = vadd.f32 %v559, %v481
        %v561 = vrot.slane %v560, 4
        %v562 = vadd.f32 %v560, %v561
        %v563 = vrot.slane %v562, 2
        %v564 = vadd.f32 %v562, %v563
        %v565 = vrot.slane %v564, 1
        %v566 = vadd.f32 %v564, %v565
        %v567 = vadd.f32 %v482, %v483
        %v568 = vadd.f32 %v567, %v484
        %v569 = vadd.f32 %v568, %v485
        %v570 = vadd.f32 %v569, %v486
        %v571 = vrot.slane %v570, 4
        %v572 = vadd.f32 %v570, %v571
        %v573 = vrot.slane %v572, 2
        %v574 = vadd.f32 %v572, %v573
        %v575 = vrot.slane %v574, 1
        %v576 = vadd.f32 %v574, %v575
        %v577 = vadd.f32 %v487, %v488
        %v578 = vadd.f32 %v577, %v489
        %v579 = vadd.f32 %v578, %v490
        %v580 = vadd.f32 %v579, %v491
        %v581 = vrot.slane %v580, 4
        %v582 = vadd.f32 %v580, %v581
        %v583 = vrot.slane %v582, 2
        %v584 = vadd.f32 %v582, %v583
        %v585 = vrot.slane %v584, 1
        %v586 = vadd.f32 %v584, %v585
        %v587 = vadd.f32 %v492, %v493
        %v588 = vadd.f32 %v587, %v494
        %v589 = vadd.f32 %v588, %v495
        %v590 = vadd.f32 %v589, %v496
        %v591 = vrot.slane %v590, 4
        %v592 = vadd.f32 %v590, %v591
        %v593 = vrot.slane %v592, 2
        %v594 = vadd.f32 %v592, %v593
        %v595 = vrot.slane %v594, 1
        %v596 = vadd.f32 %v594, %v595
        %v597 = vadd.f32 %v497, %v498
        %v598 = vadd.f32 %v597, %v499
        %v599 = vadd.f32 %v598, %v500
        %v600 = vadd.f32 %v599, %v501
        %v601 = vrot.slane %v600, 4
        %v602 = vadd.f32 %v600, %v601
        %v603 = vrot.slane %v602, 2
        %v604 = vadd.f32 %v602, %v603
        %v605 = vrot.slane %v604, 1
        %v606 = vadd.f32 %v604, %v605
        %v607 = vadd.f32 %v502, %v503
        %v608 = vadd.f32 %v607, %v504
        %v609 = vadd.f32 %v608, %v505
        %v610 = vadd.f32 %v609, %v506
        %v611 = vrot.slane %v610, 4
        %v612 = vadd.f32 %v610, %v611
        %v613 = vrot.slane %v612, 2
        %v614 = vadd.f32 %v612, %v613
        %v615 = vrot.slane %v614, 1
        %v616 = vadd.f32 %v614, %v615
        %v617 = vadd.f32 %v507, %v508
        %v618 = vadd.f32 %v617, %v509
        %v619 = vadd.f32 %v618, %v510
        %v620 = vadd.f32 %v619, %v511
        %v621 = vrot.slane %v620, 4
        %v622 = vadd.f32 %v620, %v621
        %v623 = vrot.slane %v622, 2
        %v624 = vadd.f32 %v622, %v623
        %v625 = vrot.slane %v624, 1
        %v626 = vadd.f32 %v624, %v625
        %v627 = vadd.f32 %v512, %v513
        %v628 = vadd.f32 %v627, %v514
        %v629 = vadd.f32 %v628, %v515
        %v630 = vadd.f32 %v629, %v516
        %v631 = vrot.slane %v630, 4
        %v632 = vadd.f32 %v630, %v631
        %v633 = vrot.slane %v632, 2
        %v634 = vadd.f32 %v632, %v633
        %v635 = vrot.slane %v634, 1
        %v636 = vadd.f32 %v634, %v635
        %v637 = vadd.f32 %v517, %v518
        %v638 = vadd.f32 %v637, %v519
        %v639 = vadd.f32 %v638, %v520
        %v640 = vadd.f32 %v639, %v521
        %v641 = vrot.slane %v640, 4
        %v642 = vadd.f32 %v640, %v641
        %v643 = vrot.slane %v642, 2
        %v644 = vadd.f32 %v642, %v643
        %v645 = vrot.slane %v644, 1
        %v646 = vadd.f32 %v644, %v645
        %v647 = vadd.f32 %v522, %v523
        %v648 = vadd.f32 %v647, %v524
        %v649 = vadd.f32 %v648, %v525
        %v650 = vadd.f32 %v649, %v526
        %v651 = vrot.slane %v650, 4
        %v652 = vadd.f32 %v650, %v651
        %v653 = vrot.slane %v652, 2
        %v654 = vadd.f32 %v652, %v653
        %v655 = vrot.slane %v654, 1
        %v656 = vadd.f32 %v654, %v655
        %v657 = vadd.f32 %v527, %v528
        %v658 = vadd.f32 %v657, %v529
        %v659 = vadd.f32 %v658, %v530
        %v660 = vadd.f32 %v659, %v531
        %v661 = vrot.slane %v660, 4
        %v662 = vadd.f32 %v660, %v661
        %v663 = vrot.slane %v662, 2
        %v664 = vadd.f32 %v662, %v663
        %v665 = vrot.slane %v664, 1
        %v666 = vadd.f32 %v664, %v665
        %v667 = vadd.f32 %v532, %v533
        %v668 = vadd.f32 %v667, %v534
        %v669 = vadd.f32 %v668, %v535
        %v670 = vadd.f32 %v669, %v536
        %v671 = vrot.slane %v670, 4
        %v672 = vadd.f32 %v670, %v671
        %v673 = vrot.slane %v672, 2
        %v674 = vadd.f32 %v672, %v673
        %v675 = vrot.slane %v674, 1
        %v676 = vadd.f32 %v674, %v675
        %v677 = vadd.f32 %v537, %v538
        %v678 = vadd.f32 %v677, %v539
        %v679 = vadd.f32 %v678, %v540
        %v680 = vadd.f32 %v679, %v541
        %v681 = vrot.slane %v680, 4
        %v682 = vadd.f32 %v680, %v681
        %v683 = vrot.slane %v682, 2
        %v684 = vadd.f32 %v682, %v683
        %v685 = vrot.slane %v684, 1
        %v686 = vadd.f32 %v684, %v685
        %v687 = vadd.f32 %v542, %v543
        %v688 = vadd.f32 %v687, %v544
        %v689 = vadd.f32 %v688, %v545
        %v690 = vadd.f32 %v689, %v546
        %v691 = vrot.slane %v690, 4
        %v692 = vadd.f32 %v690, %v691
        %v693 = vrot.slane %v692, 2
        %v694 = vadd.f32 %v692, %v693
        %v695 = vrot.slane %v694, 1
        %v696 = vadd.f32 %v694, %v695
        %v697 = vadd.f32 %v547, %v548
        %v698 = vadd.f32 %v697, %v549
        %v699 = vadd.f32 %v698, %v550
        %v700 = vadd.f32 %v699, %v551
        %v701 = vrot.slane %v700, 4
        %v702 = vadd.f32 %v700, %v701
        %v703 = vrot.slane %v702, 2
        %v704 = vadd.f32 %v702, %v703
        %v705 = vrot.slane %v704, 1
        %v706 = vadd.f32 %v704, %v705
        %v707 = vadd.f32 %v552, %v553
        %v708 = vadd.f32 %v707, %v554
        %v709 = vadd.f32 %v708, %v555
        %v710 = vadd.f32 %v709, %v556
        %v711 = vrot.slane %v710, 4
        %v712 = vadd.f32 %v710, %v711
        %v713 = vrot.slane %v712, 2
        %v714 = vadd.f32 %v712, %v713
        %v715 = vrot.slane %v714, 1
        %v716 = vadd.f32 %v714, %v715
        %v717 = vlaneseq
        %v718 = vshrl.u32 %v717, 7
        %v719 = vadd.s32 %v718, 8
        %s720 = smul.u32 %s32, 16
        %v721 = vstv %s720
        %v722 = vadd.s32 %v718, %v721
        %v723 = vadd.s32 %v719, %v721
        %v724 = vld [vmem:[%s301] sm:$0x1]
        %v725 = vperm.slane %v724, 0
        %vm726 = vcmp.lt.s32.totalorder %v722, %v725
        %vm727 = vcmp.lt.s32.totalorder %v723, %v725
        %vm744 = vcmask 1041409
        %v745 = vsel %vm744, %v576, %v566
        %vm746 = vcmask 1042434
        %v747 = vsel %vm746, %v586, %v745
        %vm748 = vcmask 1043459
        %v749 = vsel %vm748, %v596, %v747
        %vm750 = vcmask 1044484
        %v751 = vsel %vm750, %v606, %v749
        %vm752 = vcmask 1045509
        %v753 = vsel %vm752, %v616, %v751
        %vm754 = vcmask 1046534
        %v755 = vsel %vm754, %v626, %v753
        %vm756 = vcmask 1047559
        %v757 = vsel %vm756, %v636, %v755
        %v758 = vsel %vm744, %v656, %v646
        %v759 = vsel %vm746, %v666, %v758
        %v760 = vsel %vm748, %v676, %v759
        %v761 = vsel %vm750, %v686, %v760
        %v762 = vsel %vm752, %v696, %v761
        %v763 = vsel %vm754, %v706, %v762
        %v764 = vsel %vm756, %v716, %v763
        %v767 = vsel %vm726, %v757, -1e+30
        %v768 = vsel %vm727, %v764, -1e+30
        %v769 = vld [vmem:[#allocation2] sm:$0x1]
        %v770 = vmax.f32 %v767, %v768
        %v771 = vrot.slane %v770, 4
        %v772 = vmax.f32 %v770, %v771
        %v773 = vrot.slane %v772, 2
        %v774 = vmax.f32 %v772, %v773
        %v775 = vrot.slane %v774, 1
        %v776 = vmax.f32 %v774, %v775
        %v777 = vmax.f32 %v769, %v776
        %v778 = vsub.f32 %v769, %v777
        %v779 = vmul.f32 %v778, 1.442695
        %v780 = vpow.pop %v779
        %v782 = vperm.slane %v777, 0
        %v784 = vsub.f32 %v767, %v782
        %v785 = vsub.f32 %v768, %v782
        %v786 = vmul.f32 %v784, 1.442695
        %v787 = vpow.pop %v786
        %v788 = vmul.f32 %v785, 1.442695
        %v789 = vpow.pop %v788
        %v790 = vsel %vm726, %v787, 0.0
        %v791 = vsel %vm727, %v789, 0.0
        %v792 = vld [vmem:[#allocation3] sm:$0x1]
        %v793 = vmul.f32 %v780, %v792
        %v794 = vadd.f32 %v790, %v791
        %v795 = vrot.slane %v794, 4
        %v796 = vadd.f32 %v794, %v795
        %v797 = vrot.slane %v796, 2
        %v798 = vadd.f32 %v796, %v797
        %v799 = vrot.slane %v798, 1
        %v800 = vadd.f32 %v798, %v799
        %v801 = vadd.f32 %v793, %v800
        %802 = vst [vmem:[#allocation3] sm:$0x1] %v801
        %803 = vst [vmem:[#allocation2] sm:$0x1] %v777
        %v804 = vsel %vm726, 1, 0
        %v805 = vsel %vm727, 1, 0
        %v806 = vrot.slane %v804, 1
        %v807 = vrot.slane %v804, 2
        %v808 = vrot.slane %v804, 3
        %v809 = vrot.slane %v804, 4
        %v810 = vrot.slane %v804, 5
        %v811 = vrot.slane %v804, 6
        %v812 = vrot.slane %v804, 7
        %v813 = vrot.slane %v805, 1
        %v814 = vrot.slane %v805, 2
        %v815 = vrot.slane %v805, 3
        %v816 = vrot.slane %v805, 4
        %v817 = vrot.slane %v805, 5
        %v818 = vrot.slane %v805, 6
        %v819 = vrot.slane %v805, 7
        %vm820 = vcmp.ne.s32.totalorder %v806, 0
        %vm821 = vcmp.ne.s32.totalorder %v807, 0
        %vm822 = vcmp.ne.s32.totalorder %v808, 0
        %vm823 = vcmp.ne.s32.totalorder %v809, 0
        %vm824 = vcmp.ne.s32.totalorder %v810, 0
        %vm825 = vcmp.ne.s32.totalorder %v811, 0
        %vm826 = vcmp.ne.s32.totalorder %v812, 0
        %vm827 = vcmp.ne.s32.totalorder %v813, 0
        %vm828 = vcmp.ne.s32.totalorder %v814, 0
        %vm829 = vcmp.ne.s32.totalorder %v815, 0
        %vm830 = vcmp.ne.s32.totalorder %v816, 0
        %vm831 = vcmp.ne.s32.totalorder %v817, 0
        %vm832 = vcmp.ne.s32.totalorder %v818, 0
        %vm833 = vcmp.ne.s32.totalorder %v819, 0
        %v834 = vld [vmem:[%s331] sm:$0xff]
        %v835 = vld [vmem:[%s331 + $0x8] sm:$0xff]
        %v836 = vld [vmem:[%s331 + $0x10] sm:$0xff]
        %v837 = vld [vmem:[%s331 + $0x18] sm:$0xff]
        %v838 = vld [vmem:[%s331 + $0x20] sm:$0xff]
        %v839 = vld [vmem:[%s331 + $0x28] sm:$0xff]
        %v840 = vld [vmem:[%s331 + $0x30] sm:$0xff]
        %v841 = vld [vmem:[%s331 + $0x38] sm:$0xff]
        %v842 = vld [vmem:[%s331 + $0x40] sm:$0xff]
        %v843 = vld [vmem:[%s331 + $0x48] sm:$0xff]
        %v844 = vld [vmem:[%s331 + $0x50] sm:$0xff]
        %v845 = vld [vmem:[%s331 + $0x58] sm:$0xff]
        %v846 = vld [vmem:[%s331 + $0x60] sm:$0xff]
        %v847 = vld [vmem:[%s331 + $0x68] sm:$0xff]
        %v848 = vld [vmem:[%s331 + $0x70] sm:$0xff]
        %v849 = vld [vmem:[%s331 + $0x78] sm:$0xff]
        %v850 = vld [vmem:[%s331 + $0x80] sm:$0xff]
        %v851 = vld [vmem:[%s331 + $0x88] sm:$0xff]
        %v852 = vld [vmem:[%s331 + $0x90] sm:$0xff]
        %v853 = vld [vmem:[%s331 + $0x98] sm:$0xff]
        %v854 = vld [vmem:[%s331 + $0xa0] sm:$0xff]
        %v855 = vld [vmem:[%s331 + $0xa8] sm:$0xff]
        %v856 = vld [vmem:[%s331 + $0xb0] sm:$0xff]
        %v857 = vld [vmem:[%s331 + $0xb8] sm:$0xff]
        %v858 = vld [vmem:[%s331 + $0xc0] sm:$0xff]
        %v859 = vld [vmem:[%s331 + $0xc8] sm:$0xff]
        %v860 = vld [vmem:[%s331 + $0xd0] sm:$0xff]
        %v861 = vld [vmem:[%s331 + $0xd8] sm:$0xff]
        %v862 = vld [vmem:[%s331 + $0xe0] sm:$0xff]
        %v863 = vld [vmem:[%s331 + $0xe8] sm:$0xff]
        %v864 = vld [vmem:[%s331 + $0xf0] sm:$0xff]
        %v865 = vld [vmem:[%s331 + $0xf8] sm:$0xff]
        %v866 = vld [vmem:[%s331 + $0x100] sm:$0xff]
        %v867 = vld [vmem:[%s331 + $0x108] sm:$0xff]
        %v868 = vld [vmem:[%s331 + $0x110] sm:$0xff]
        %v869 = vld [vmem:[%s331 + $0x118] sm:$0xff]
        %v870 = vld [vmem:[%s331 + $0x120] sm:$0xff]
        %v871 = vld [vmem:[%s331 + $0x128] sm:$0xff]
        %v872 = vld [vmem:[%s331 + $0x130] sm:$0xff]
        %v873 = vld [vmem:[%s331 + $0x138] sm:$0xff]
        %v874 = vld [vmem:[%s331 + $0x140] sm:$0xff]
        %v875 = vld [vmem:[%s331 + $0x148] sm:$0xff]
        %v876 = vld [vmem:[%s331 + $0x150] sm:$0xff]
        %v877 = vld [vmem:[%s331 + $0x158] sm:$0xff]
        %v878 = vld [vmem:[%s331 + $0x160] sm:$0xff]
        %v879 = vld [vmem:[%s331 + $0x168] sm:$0xff]
        %v880 = vld [vmem:[%s331 + $0x170] sm:$0xff]
        %v881 = vld [vmem:[%s331 + $0x178] sm:$0xff]
        %v882 = vsel %vm820, 1, 0
        %v883 = vsel %vm821, 1, 0
        %v884 = vsel %vm822, 1, 0
        %v885 = vsel %vm823, 1, 0
        %v886 = vsel %vm824, 1, 0
        %v887 = vsel %vm825, 1, 0
        %v888 = vsel %vm826, 1, 0
        %v889 = vsel %vm827, 1, 0
        %v890 = vsel %vm828, 1, 0
        %v891 = vsel %vm829, 1, 0
        %v892 = vsel %vm830, 1, 0
        %v893 = vsel %vm831, 1, 0
        %v894 = vsel %vm832, 1, 0
        %v895 = vsel %vm833, 1, 0
        %v896 = vperm.slane %v804, 0
        %v897 = vperm.slane %v882, 0
        %v898 = vperm.slane %v883, 0
        %v899 = vperm.slane %v884, 0
        %v900 = vperm.slane %v885, 0
        %v901 = vperm.slane %v886, 0
        %v902 = vperm.slane %v887, 0
        %v903 = vperm.slane %v888, 0
        %v904 = vperm.slane %v805, 0
        %v905 = vperm.slane %v889, 0
        %v906 = vperm.slane %v890, 0
        %v907 = vperm.slane %v891, 0
        %v908 = vperm.slane %v892, 0
        %v909 = vperm.slane %v893, 0
        %v910 = vperm.slane %v894, 0
        %v911 = vperm.slane %v895, 0
        %vm912 = vcmp.eq.s32.totalorder %v896, 1
        %vm913 = vcmp.eq.s32.totalorder %v897, 1
        %vm914 = vcmp.eq.s32.totalorder %v898, 1
        %vm915 = vcmp.eq.s32.totalorder %v899, 1
        %vm916 = vcmp.eq.s32.totalorder %v900, 1
        %vm917 = vcmp.eq.s32.totalorder %v901, 1
        %vm918 = vcmp.eq.s32.totalorder %v902, 1
        %vm919 = vcmp.eq.s32.totalorder %v903, 1
        %vm920 = vcmp.eq.s32.totalorder %v904, 1
        %vm921 = vcmp.eq.s32.totalorder %v905, 1
        %vm922 = vcmp.eq.s32.totalorder %v906, 1
        %vm923 = vcmp.eq.s32.totalorder %v907, 1
        %vm924 = vcmp.eq.s32.totalorder %v908, 1
        %vm925 = vcmp.eq.s32.totalorder %v909, 1
        %vm926 = vcmp.eq.s32.totalorder %v910, 1
        %vm927 = vcmp.eq.s32.totalorder %v911, 1
        %v928 = vsel %vm912, %v834, 0.0
        %v929 = vsel %vm912, %v835, 0.0
        %v930 = vsel %vm912, %v836, 0.0
        %v931 = vsel %vm913, %v837, 0.0
        %v932 = vsel %vm913, %v838, 0.0
        %v933 = vsel %vm913, %v839, 0.0
        %v934 = vsel %vm914, %v840, 0.0
        %v935 = vsel %vm914, %v841, 0.0
        %v936 = vsel %vm914, %v842, 0.0
        %v937 = vsel %vm915, %v843, 0.0
        %v938 = vsel %vm915, %v844, 0.0
        %v939 = vsel %vm915, %v845, 0.0
        %v940 = vsel %vm916, %v846, 0.0
        %v941 = vsel %vm916, %v847, 0.0
        %v942 = vsel %vm916, %v848, 0.0
        %v943 = vsel %vm917, %v849, 0.0
        %v944 = vsel %vm917, %v850, 0.0
        %v945 = vsel %vm917, %v851, 0.0
        %v946 = vsel %vm918, %v852, 0.0
        %v947 = vsel %vm918, %v853, 0.0
        %v948 = vsel %vm918, %v854, 0.0
        %v949 = vsel %vm919, %v855, 0.0
        %v950 = vsel %vm919, %v856, 0.0
        %v951 = vsel %vm919, %v857, 0.0
        %v952 = vsel %vm920, %v858, 0.0
        %v953 = vsel %vm920, %v859, 0.0
        %v954 = vsel %vm920, %v860, 0.0
        %v955 = vsel %vm921, %v861, 0.0
        %v956 = vsel %vm921, %v862, 0.0
        %v957 = vsel %vm921, %v863, 0.0
        %v958 = vsel %vm922, %v864, 0.0
        %v959 = vsel %vm922, %v865, 0.0
        %v960 = vsel %vm922, %v866, 0.0
        %v961 = vsel %vm923, %v867, 0.0
        %v962 = vsel %vm923, %v868, 0.0
        %v963 = vsel %vm923, %v869, 0.0
        %v964 = vsel %vm924, %v870, 0.0
        %v965 = vsel %vm924, %v871, 0.0
        %v966 = vsel %vm924, %v872, 0.0
        %v967 = vsel %vm925, %v873, 0.0
        %v968 = vsel %vm925, %v874, 0.0
        %v969 = vsel %vm925, %v875, 0.0
        %v970 = vsel %vm926, %v876, 0.0
        %v971 = vsel %vm926, %v877, 0.0
        %v972 = vsel %vm926, %v878, 0.0
        %v973 = vsel %vm927, %v879, 0.0
        %v974 = vsel %vm927, %v880, 0.0
        %v975 = vsel %vm927, %v881, 0.0
        %v978 = vrot.slane %v790, 1
        %v979 = vrot.slane %v790, 2
        %v980 = vrot.slane %v790, 3
        %v981 = vrot.slane %v790, 4
        %v982 = vrot.slane %v790, 5
        %v983 = vrot.slane %v790, 6
        %v984 = vrot.slane %v790, 7
        %v985 = vrot.slane %v791, 1
        %v986 = vrot.slane %v791, 2
        %v987 = vrot.slane %v791, 3
        %v988 = vrot.slane %v791, 4
        %v989 = vrot.slane %v791, 5
        %v990 = vrot.slane %v791, 6
        %v991 = vrot.slane %v791, 7
        %v992 = vperm.slane %v790, 0
        %v993 = vperm.slane %v978, 0
        %v994 = vperm.slane %v979, 0
        %v995 = vperm.slane %v980, 0
        %v996 = vperm.slane %v981, 0
        %v997 = vperm.slane %v982, 0
        %v998 = vperm.slane %v983, 0
        %v999 = vperm.slane %v984, 0
        %v1000 = vperm.slane %v791, 0
        %v1001 = vperm.slane %v985, 0
        %v1002 = vperm.slane %v986, 0
        %v1003 = vperm.slane %v987, 0
        %v1004 = vperm.slane %v988, 0
        %v1005 = vperm.slane %v989, 0
        %v1006 = vperm.slane %v990, 0
        %v1007 = vperm.slane %v991, 0
        %v1024 = vmul.f32 %v992, %v928
        %v1025 = vmul.f32 %v992, %v929
        %v1026 = vmul.f32 %v992, %v930
        %v1027 = vmul.f32 %v993, %v931
        %v1028 = vmul.f32 %v993, %v932
        %v1029 = vmul.f32 %v993, %v933
        %v1030 = vmul.f32 %v994, %v934
        %v1031 = vmul.f32 %v994, %v935
        %v1032 = vmul.f32 %v994, %v936
        %v1033 = vmul.f32 %v995, %v937
        %v1034 = vmul.f32 %v995, %v938
        %v1035 = vmul.f32 %v995, %v939
        %v1036 = vmul.f32 %v996, %v940
        %v1037 = vmul.f32 %v996, %v941
        %v1038 = vmul.f32 %v996, %v942
        %v1039 = vmul.f32 %v997, %v943
        %v1040 = vmul.f32 %v997, %v944
        %v1041 = vmul.f32 %v997, %v945
        %v1042 = vmul.f32 %v998, %v946
        %v1043 = vmul.f32 %v998, %v947
        %v1044 = vmul.f32 %v998, %v948
        %v1045 = vmul.f32 %v999, %v949
        %v1046 = vmul.f32 %v999, %v950
        %v1047 = vmul.f32 %v999, %v951
        %v1048 = vmul.f32 %v1000, %v952
        %v1049 = vmul.f32 %v1000, %v953
        %v1050 = vmul.f32 %v1000, %v954
        %v1051 = vmul.f32 %v1001, %v955
        %v1052 = vmul.f32 %v1001, %v956
        %v1053 = vmul.f32 %v1001, %v957
        %v1054 = vmul.f32 %v1002, %v958
        %v1055 = vmul.f32 %v1002, %v959
        %v1056 = vmul.f32 %v1002, %v960
        %v1057 = vmul.f32 %v1003, %v961
        %v1058 = vmul.f32 %v1003, %v962
        %v1059 = vmul.f32 %v1003, %v963
        %v1060 = vmul.f32 %v1004, %v964
        %v1061 = vmul.f32 %v1004, %v965
        %v1062 = vmul.f32 %v1004, %v966
        %v1063 = vmul.f32 %v1005, %v967
        %v1064 = vmul.f32 %v1005, %v968
        %v1065 = vmul.f32 %v1005, %v969
        %v1066 = vmul.f32 %v1006, %v970
        %v1067 = vmul.f32 %v1006, %v971
        %v1068 = vmul.f32 %v1006, %v972
        %v1069 = vmul.f32 %v1007, %v973
        %v1070 = vmul.f32 %v1007, %v974
        %v1071 = vmul.f32 %v1007, %v975
        %v1072 = vadd.f32 %v1024, %v1027
        %v1073 = vadd.f32 %v1072, %v1030
        %v1074 = vadd.f32 %v1073, %v1033
        %v1075 = vadd.f32 %v1074, %v1036
        %v1076 = vadd.f32 %v1075, %v1039
        %v1077 = vadd.f32 %v1076, %v1042
        %v1078 = vadd.f32 %v1077, %v1045
        %v1079 = vadd.f32 %v1078, %v1048
        %v1080 = vadd.f32 %v1079, %v1051
        %v1081 = vadd.f32 %v1080, %v1054
        %v1082 = vadd.f32 %v1081, %v1057
        %v1083 = vadd.f32 %v1082, %v1060
        %v1084 = vadd.f32 %v1083, %v1063
        %v1085 = vadd.f32 %v1084, %v1066
        %v1086 = vadd.f32 %v1085, %v1069
        %v1087 = vadd.f32 %v1025, %v1028
        %v1088 = vadd.f32 %v1087, %v1031
        %v1089 = vadd.f32 %v1088, %v1034
        %v1090 = vadd.f32 %v1089, %v1037
        %v1091 = vadd.f32 %v1090, %v1040
        %v1092 = vadd.f32 %v1091, %v1043
        %v1093 = vadd.f32 %v1092, %v1046
        %v1094 = vadd.f32 %v1093, %v1049
        %v1095 = vadd.f32 %v1094, %v1052
        %v1096 = vadd.f32 %v1095, %v1055
        %v1097 = vadd.f32 %v1096, %v1058
        %v1098 = vadd.f32 %v1097, %v1061
        %v1099 = vadd.f32 %v1098, %v1064
        %v1100 = vadd.f32 %v1099, %v1067
        %v1101 = vadd.f32 %v1100, %v1070
        %v1102 = vadd.f32 %v1026, %v1029
        %v1103 = vadd.f32 %v1102, %v1032
        %v1104 = vadd.f32 %v1103, %v1035
        %v1105 = vadd.f32 %v1104, %v1038
        %v1106 = vadd.f32 %v1105, %v1041
        %v1107 = vadd.f32 %v1106, %v1044
        %v1108 = vadd.f32 %v1107, %v1047
        %v1109 = vadd.f32 %v1108, %v1050
        %v1110 = vadd.f32 %v1109, %v1053
        %v1111 = vadd.f32 %v1110, %v1056
        %v1112 = vadd.f32 %v1111, %v1059
        %v1113 = vadd.f32 %v1112, %v1062
        %v1114 = vadd.f32 %v1113, %v1065
        %v1115 = vadd.f32 %v1114, %v1068
        %v1116 = vadd.f32 %v1115, %v1071
        %v1117 = vld [vmem:[#allocation4] sm:$0xff]
        %v1118 = vld [vmem:[#allocation4 + $0x8] sm:$0xff]
        %v1119 = vld [vmem:[#allocation4 + $0x10] sm:$0xff]
        %v1121 = vperm.slane %v780, 0
        %v1123 = vmul.f32 %v1121, %v1117
        %v1124 = vmul.f32 %v1121, %v1118
        %v1125 = vmul.f32 %v1121, %v1119
        %v1126 = vadd.f32 %v1123, %v1086
        %v1127 = vadd.f32 %v1124, %v1101
        %v1128 = vadd.f32 %v1125, %v1116
        %1129 = vst [vmem:[#allocation4] sm:$0xff] %v1126
        %1130 = vst [vmem:[#allocation4 + $0x8] sm:$0xff] %v1127
        %1131 = vst [vmem:[#allocation4 + $0x10] sm:$0xff] %v1128
        %p1132 = scmp.eq.s32.totalorder %s32, 3
        // Predicated region
        $region57: #{tpu_custom_call.1} parent=35 // pred_check
          %p1133 = pneg %p1132
        $region58: #{tpu_custom_call.1} parent=35 // pred_check_branch
          %1135 = sbr.rel (%p1133) target = $region60
        $region59: #{tpu_custom_call.1} parent=35 // pred_region
          %v1136 = vld [vmem:[#allocation3] sm:$0x1]
          %v1137 = vmax.f32 %v1136, 1e-30
          %v1138 = vrcp.pop %v1137
          %v1139 = vmul.f32 %v1137, %v1138
          %v1140 = vsub.f32 2.0, %v1139
          %v1141 = vmul.f32 %v1138, %v1140
          %v1142 = vld [vmem:[#allocation4] sm:$0xff]
          %v1143 = vld [vmem:[#allocation4 + $0x8] sm:$0xff]
          %v1144 = vld [vmem:[#allocation4 + $0x10] sm:$0xff]
          %v1146 = vperm.slane %v1141, 0
          %v1148 = vmul.f32 %v1142, %v1146
          %v1149 = vmul.f32 %v1143, %v1146
          %v1150 = vmul.f32 %v1144, %v1146
          %1151 = vst [vmem:[%s370] sm:$0xff] %v1148
          %1152 = vst [vmem:[%s370 + $0x8] sm:$0xff] %v1149
          %1153 = vst [vmem:[%s370 + $0x10] sm:$0xff] %v1150
        $region60: #{tpu_custom_call.1} parent=35 // pred_fallthru
          _
        %s1154 = sand.u32 %s155, 1
        %s1155 = scalar_lea.sflag [#allocation7], %s1154
        %s1156 = sand.u32 %s155, 1
        %s1157 = smul.addr %s1156, 24
        %s1158 = scalar_lea.vmem [#allocation13], %s1157
        // Predicated region
        $region61: #{tpu_custom_call.1} parent=35 // pred_check
          %p1159 = pneg %p165
        $region62: #{tpu_custom_call.1} parent=35 // pred_check_branch
          %1161 = sbr.rel (%p1159) target = $region64
        $region63: #{tpu_custom_call.1} parent=35 // pred_region
          %1163 = vsyncadd %s1155, 0
          %s1164 = smul.addr %s31, 8
          %s1165 = scalar_lea.hbm %s4, %s1164
          %s1166 = sshll.u32 %s1158, 4
          %s1167 = int_to_ptr.vmem [resolvable:$true] %s1166
          %s1168 = sshll.u32 %s1165, 4
          %s1169 = int_to_ptr.hbm [resolvable:$true] %s1168
          %1174 = dma.vmem_to_hbm [thread:$0]  %s1167, 384, %s1169, %s1155, 128, 256, 8
        $region64: #{tpu_custom_call.1} parent=35 // pred_fallthru
          _
      $region36: #{tpu_custom_call.1} parent=5 // pred_fallthru
        _
      %p1175 = scmp.le.s32.totalorder 2, %s22
      // Predicated region
      $region65: #{tpu_custom_call.1} parent=5 // pred_check
        %p1176 = pneg %p1175
      $region66: #{tpu_custom_call.1} parent=5 // pred_check_branch
        %1178 = sbr.rel (%p1176) target = $region68
      $region67: #{tpu_custom_call.1} parent=5 // pred_region
        %s1179 = ssub.s32 %s22, 2
        // Predicated region
        $region69: #{tpu_custom_call.1} parent=67 // pred_check
          %p1180 = pneg %p171
        $region70: #{tpu_custom_call.1} parent=67 // pred_check_branch
          %1182 = sbr.rel (%p1180) target = $region72
        $region71: #{tpu_custom_call.1} parent=67 // pred_region
          %s1183 = sand.u32 %s156, 1
          %s1184 = scalar_lea.sflag [#allocation7], %s1183
          %s1185 = sand.u32 %s156, 1
          %s1186 = smul.addr %s1185, 24
          %s1187 = scalar_lea.vmem [#allocation13], %s1186
          %1189 = dma.done %s1184, 384
        $region72: #{tpu_custom_call.1} parent=67 // pred_fallthru
          _
      $region68: #{tpu_custom_call.1} parent=5 // pred_fallthru
        _
    $region6: #{tpu_custom_call.1} parent=1 // loop_footer
      %s26 = sadd.s32 1, %s22
    $region7: #{tpu_custom_call.1} parent=1 // loop_footer_branch
      %21 = sbr.rel target = $region3
    $region8: #{tpu_custom_call.1} parent=1 // loop_exit
      _
    %1190 = vsyncpa [#allocation6], 1
    %s1191 = scalar_lea.sflag [#allocation6], 1
    %1192 = vsyncpa %s1191, 1
    %1193 = vsyncpa [#allocation9], 1
    %s1194 = scalar_lea.sflag [#allocation9], 1
    %1195 = vsyncpa %s1194, 1
    %1196 = vsyncpa [#allocation12], 1
    %s1197 = scalar_lea.sflag [#allocation12], 1
    %1198 = vsyncpa %s1197, 1
    %1199 = vsyncpa [#allocation7], 1
    %s1200 = scalar_lea.sflag [#allocation7], 1
    %1201 = vsyncpa %s1200, 1

</llo_original>
